<compile_context>
chip_gen: v7x
topology: tpu7x:2x2x1
jax: 0.10.0
libtpu: 0.0.40
codegen_flags: <defaults>
</compile_context>

<pallas_src>
import jax
import jax.numpy as jnp
import numpy as np
from jax.experimental import pallas as pl
from jax.experimental.pallas import tpu as pltpu

LANES = 128  # pad output-channel / class dims to full lane width


def _full_spec(shape):
    # Single whole-array block (tiny shapes; no grid needed).
    return pl.BlockSpec(shape, lambda: (0,) * len(shape))


def _make_pool_matrix(n, hw):
    """[N, N*H*W] block-diagonal constant with 1/(H*W) entries (bf16-exact)."""
    pm = np.zeros((n, n * hw), np.float32)
    for b in range(n):
        pm[b, b * hw:(b + 1) * hw] = 1.0 / hw
    # Guard the correctness concern from review: each row must average exactly.
    assert np.allclose(pm.sum(axis=1), 1.0), "pool matrix rows must sum to 1"
    return jnp.asarray(pm, dtype=jnp.bfloat16)


def deep_classifier_forward(x_nchw, params):
    """Forward pass equivalent to DeepClassifier(net)(x) with the synthetic net."""
    w_conv, b_conv, w_fc, b_fc = (params["w_conv"], params["b_conv"],
                                  params["w_fc"], params["b_fc"])
    N, Cin, H, W = x_nchw.shape
    Cout, _, KH, KW = w_conv.shape
    NC = w_fc.shape[0]
    P = N * H * W                     # im2col rows == valid conv output positions
    K = KH * KW * Cin                 # im2col contraction dim (36)

    # ---- wrapper-side glue (tiny; fused into one XLA fusion under jit) -----
    # im2col patches: [P, K] with column order (kh, kw, cin); ones column folds
    # the conv bias in (-> K+1 = 37).  Cast to bf16 for the MXU.
    x_nhwc = jnp.transpose(x_nchw, (0, 2, 3, 1))                     # [N,H,W,Cin]
    x_pad = jnp.pad(x_nhwc, ((0, 0), (1, 1), (1, 1), (0, 0)))        # [N,H+2,W+2,Cin]
    taps = [x_pad[:, kh:kh + H, kw:kw + W, :]
            for kh in range(KH) for kw in range(KW)]                 # each [N,H,W,Cin]
    patches = jnp.concatenate(taps, axis=-1).reshape(P, K)
    patches = jnp.concatenate(
        [patches, jnp.ones((P, 1), patches.dtype)], axis=-1).astype(jnp.bfloat16)

    # Conv weights: [Cout, Cin, KH, KW] -> [K, Cout] in matching (kh,kw,cin)
    # order, with the bias appended as the last row, lane-padded to 128, bf16.
    w_mat = jnp.transpose(w_conv, (2, 3, 1, 0)).reshape(K, Cout)     # [36, Cout]
    w_mat = jnp.concatenate([w_mat, b_conv.reshape(1, Cout)], axis=0)  # [37, Cout]
    w_mat = jnp.pad(w_mat, ((0, 0), (0, LANES - Cout))).astype(jnp.bfloat16)

    # FC weights: [NC, Cout] -> [128, 128] bf16 (padded rows/cols are zero).
    w_fc_pad = jnp.pad(jnp.transpose(w_fc),
                       ((0, LANES - Cout), (0, LANES - NC))).astype(jnp.bfloat16)
    b_fc_row = jnp.pad(b_fc.reshape(1, NC), ((0, 0), (0, LANES - NC)))  # f32

    # Constant bf16 pooling matrix (1/(H*W) folded in; no runtime division).
    pool_mat = _make_pool_matrix(N, H * W)                           # [N, P]

    def fused_kernel(patch_ref, wk_ref, pool_ref, wfc_ref, bfc_ref, o_ref):
        # Conv + bias as a single bf16 MXU matmul, f32 accumulation.
        conv = jnp.dot(patch_ref[...], wk_ref[...],
                       preferred_element_type=jnp.float32)           # [P, 128] f32
        # ReLU fused into the pool input; cast once to bf16 for the next dot.
        h = jnp.maximum(conv, 0.0).astype(jnp.bfloat16)              # [P, 128]
        # Global average pool as an MXU matmul (scale pre-folded).
        pooled = jnp.dot(pool_ref[...], h,
                         preferred_element_type=jnp.float32)         # [N, 128] f32
        # FC layer; f32 bias add epilogue, lane-dense store.
        logits = jnp.dot(pooled.astype(jnp.bfloat16), wfc_ref[...],
                         preferred_element_type=jnp.float32) + bfc_ref[...]
        o_ref[...] = logits                                          # [N, 128]

    out_pad = pl.pallas_call(
        fused_kernel,
        out_shape=jax.ShapeDtypeStruct((N, LANES), jnp.float32),
        in_specs=[_full_spec((P, K + 1)),
                  _full_spec((K + 1, LANES)),
                  _full_spec((N, P)),
                  _full_spec((LANES, LANES)),
                  _full_spec((1, LANES))],
        out_specs=_full_spec((N, LANES)),
    )(patches, w_mat, pool_mat, w_fc_pad, b_fc_row)

    return out_pad[:, :NC]


def init_params(key, cin=4, cout=8, k=3, num_classes=10):
    k1, k2, k3, k4 = jax.random.split(key, 4)
    w_conv = jax.random.normal(k1, (cout, cin, k, k), jnp.float32) * 0.1
    b_conv = jax.random.normal(k2, (cout,), jnp.float32) * 0.1
    w_fc = jax.random.normal(k3, (num_classes, cout), jnp.float32) * 0.1
    b_fc = jax.random.normal(k4, (num_classes,), jnp.float32) * 0.1
    return {"w_conv": w_conv, "b_conv": b_conv, "w_fc": w_fc, "b_fc": b_fc}


if __name__ == "__main__":
    key = jax.random.PRNGKey(0)
    kx, kp = jax.random.split(key)

    # Small input consistent with the module's conv-net usage: NCHW [2, 4, 16, 16]
    x = jax.random.normal(kx, (2, 4, 16, 16), jnp.float32)
    params = init_params(kp)

    forward = jax.jit(deep_classifier_forward)
    logits = forward(x, params)
    jax.block_until_ready(logits)

    # Pure-JAX f32 reference of the same net.  Tolerance is loose because the
    # kernel runs all matmul operands in bf16 (f32 accumulation).
    x_nhwc = jnp.transpose(x, (0, 2, 3, 1))
    ref = jax.lax.conv_general_dilated(
        x_nhwc, jnp.transpose(params["w_conv"], (2, 3, 1, 0)),
        window_strides=(1, 1), padding="SAME",
        dimension_numbers=("NHWC", "HWIO", "NHWC"))
    ref = jnp.maximum(ref + params["b_conv"], 0.0)
    ref = jnp.mean(ref, axis=(1, 2))
    ref = ref @ params["w_fc"].T + params["b_fc"]
    assert jnp.allclose(logits, ref, atol=2e-2, rtol=2e-2), "mismatch vs reference"

    print("KERNEL_OK")
</pallas_src>

<mosaic_0001>
module attributes {stable_mosaic.version = 11 : i64} {
  func.func @fused_kernel(%arg0: memref<512x37xbf16, #tpu.memory_space<vmem>>, %arg1: memref<37x128xbf16, #tpu.memory_space<vmem>>, %arg2: memref<2x512xbf16, #tpu.memory_space<vmem>>, %arg3: memref<128x128xbf16, #tpu.memory_space<vmem>>, %arg4: memref<1x128xf32, #tpu.memory_space<vmem>>, %arg5: memref<2x128xf32, #tpu.memory_space<vmem>>) attributes {dimension_semantics = [], scalar_prefetch = 0 : i64, scratch_operands = 0 : i64, tpu.core_type = #tpu.core_type<tc>} {
    %c0 = arith.constant 0 : index
    %c0_0 = arith.constant 0 : index
    %0 = vector.load %arg0[%c0, %c0_0] : memref<512x37xbf16, #tpu.memory_space<vmem>>, vector<512x37xbf16>
    %c0_1 = arith.constant 0 : index
    %c0_2 = arith.constant 0 : index
    %1 = vector.load %arg1[%c0_1, %c0_2] : memref<37x128xbf16, #tpu.memory_space<vmem>>, vector<37x128xbf16>
    %cst = arith.constant dense<0.000000e+00> : vector<512x128xf32>
    %2 = tpu.matmul %0, %1, %cst {dimension_numbers = #tpu.dot_dimension_numbers<[1], [0], [0], [1], [0, 0, 1, 1], [], []>} : vector<512x37xbf16>, vector<37x128xbf16>, vector<512x128xf32> -> vector<512x128xf32>
    %cst_3 = arith.constant 0.000000e+00 : f32
    %3 = vector.broadcast %cst_3 : f32 to vector<512x128xf32>
    %4 = arith.maximumf %2, %3 : vector<512x128xf32>
    %5 = arith.truncf %4 : vector<512x128xf32> to vector<512x128xbf16>
    %c0_4 = arith.constant 0 : index
    %c0_5 = arith.constant 0 : index
    %6 = vector.load %arg2[%c0_4, %c0_5] : memref<2x512xbf16, #tpu.memory_space<vmem>>, vector<2x512xbf16>
    %cst_6 = arith.constant dense<0.000000e+00> : vector<2x128xf32>
    %7 = tpu.matmul %6, %5, %cst_6 {dimension_numbers = #tpu.dot_dimension_numbers<[1], [0], [0], [1], [0, 0, 1, 1], [], []>} : vector<2x512xbf16>, vector<512x128xbf16>, vector<2x128xf32> -> vector<2x128xf32>
    %8 = arith.truncf %7 : vector<2x128xf32> to vector<2x128xbf16>
    %c0_7 = arith.constant 0 : index
    %c0_8 = arith.constant 0 : index
    %9 = vector.load %arg3[%c0_7, %c0_8] : memref<128x128xbf16, #tpu.memory_space<vmem>>, vector<128x128xbf16>
    %cst_9 = arith.constant dense<0.000000e+00> : vector<2x128xf32>
    %10 = tpu.matmul %8, %9, %cst_9 {dimension_numbers = #tpu.dot_dimension_numbers<[1], [0], [0], [1], [0, 0, 1, 1], [], []>} : vector<2x128xbf16>, vector<128x128xbf16>, vector<2x128xf32> -> vector<2x128xf32>
    %c0_10 = arith.constant 0 : index
    %c0_11 = arith.constant 0 : index
    %11 = vector.load %arg4[%c0_10, %c0_11] : memref<1x128xf32, #tpu.memory_space<vmem>>, vector<1x128xf32>
    %12 = vector.broadcast %11 : vector<1x128xf32> to vector<2x128xf32>
    %13 = arith.addf %10, %12 : vector<2x128xf32>
    %c0_12 = arith.constant 0 : index
    %c0_13 = arith.constant 0 : index
    %14 = vector.load %arg5[%c0_12, %c0_13] : memref<2x128xf32, #tpu.memory_space<vmem>>, vector<2x128xf32>
    tpu.vector_store %arg5[%c0_12, %c0_13], %13 {strides = array<i32>} : memref<2x128xf32, #tpu.memory_space<vmem>>, vector<2x128xf32>,
    return
  }
}

</mosaic_0001>

<llo_original>
// kernel: deep_classifier_forward.1
$region0: #{deep_classifier_forward.1}
  #allocation0 [shape = 'u32[]', space=smem, size = 0x4, offset = 0x4, fixed_abs, tag = 'smem constant byte address 0x4 - core index']
  #allocation1 [shape = 'u32[144,128]{1,0:T(1,128)}', space=vmem, size = 0x12000, scoped, tag = 'internal scratch']
  %s0 = inlined_call_operand.vmem [shape: bf16[512,37], index: 0, kind: input, shape index: {}]
  %s1 = inlined_call_operand.vmem [shape: bf16[37,128], index: 1, kind: input, shape index: {}]
  %s2 = inlined_call_operand.vmem [shape: bf16[2,512], index: 2, kind: input, shape index: {}]
  %s3 = inlined_call_operand.vmem [shape: bf16[128,128], index: 3, kind: input, shape index: {}]
  %s4 = inlined_call_operand.vmem [shape: f32[1,128], index: 4, kind: input, shape index: {}]
  %s5 = inlined_call_operand.hbm [shape: f32[2,128], index: 5, kind: output, shape index: {}]
  %s6 = sld [smem:[#allocation0]]
  $region30: #{deep_classifier_forward.1} parent=0
    _
  %s8 = ssub.s32 1, %s6
  %s9 = scalar_select 0, %s8, %s6
  $region1: #{deep_classifier_forward.1} parent=0
    #allocation2 [shape = 'u8[1024]{0}', space=vmem, size = 0x400, scoped, tag = 'output window, operand 0, single buffered']
    #allocation3 [shape = 's32[1]{0}', space=sflag, size = 0x4, scoped, tag = 'scoped memory for deep_classifier_forward.1']
    %10 = vsyncpa [#allocation3], 0
    // Predicated region
    $region2: #{deep_classifier_forward.1} parent=1 // pred_check
      _
    $region3: #{deep_classifier_forward.1} parent=1 // pred_check_branch
      %12 = sbr.rel (0) target = $region5
    $region4: #{deep_classifier_forward.1} parent=1 // pred_region
      _
    $region5: #{deep_classifier_forward.1} parent=1 // pred_fallthru
      _
    // Predicated region
    $region6: #{deep_classifier_forward.1} parent=1 // pred_check
      _
    $region7: #{deep_classifier_forward.1} parent=1 // pred_check_branch
      %14 = sbr.rel (0) target = $region9
    $region8: #{deep_classifier_forward.1} parent=1 // pred_region
      _
    $region9: #{deep_classifier_forward.1} parent=1 // pred_fallthru
      _
    // Predicated region
    $region10: #{deep_classifier_forward.1} parent=1 // pred_check
      _
    $region11: #{deep_classifier_forward.1} parent=1 // pred_check_branch
      %16 = sbr.rel (0) target = $region13
    $region12: #{deep_classifier_forward.1} parent=1 // pred_region
      _
    $region13: #{deep_classifier_forward.1} parent=1 // pred_fallthru
      _
    // Predicated region
    $region14: #{deep_classifier_forward.1} parent=1 // pred_check
      _
    $region15: #{deep_classifier_forward.1} parent=1 // pred_check_branch
      %18 = sbr.rel (0) target = $region17
    $region16: #{deep_classifier_forward.1} parent=1 // pred_region
      _
    $region17: #{deep_classifier_forward.1} parent=1 // pred_fallthru
      _
    // Predicated region
    $region18: #{deep_classifier_forward.1} parent=1 // pred_check
      _
    $region19: #{deep_classifier_forward.1} parent=1 // pred_check_branch
      %20 = sbr.rel (0) target = $region21
    $region20: #{deep_classifier_forward.1} parent=1 // pred_region
      _
    $region21: #{deep_classifier_forward.1} parent=1 // pred_fallthru
      _
    %v22 = vld [vmem:[%s0] sm:$0xf]
    %v23 = vld [vmem:[%s0 + $0x4] sm:$0xf]
    %v24 = vld [vmem:[%s0 + $0x8] sm:$0xf]
    %v25 = vld [vmem:[%s0 + $0xc] sm:$0xf]
    %v26 = vld [vmem:[%s0 + $0x10] sm:$0xf]
    %v27 = vld [vmem:[%s0 + $0x14] sm:$0xf]
    %v28 = vld [vmem:[%s0 + $0x18] sm:$0xf]
    %v29 = vld [vmem:[%s0 + $0x1c] sm:$0xf]
    %v30 = vld [vmem:[%s0 + $0x20] sm:$0xf]
    %v31 = vld [vmem:[%s0 + $0x24] sm:$0xf]
    %v32 = vld [vmem:[%s0 + $0x28] sm:$0xf]
    %v33 = vld [vmem:[%s0 + $0x2c] sm:$0xf]
    %v34 = vld [vmem:[%s0 + $0x30] sm:$0xf]
    %v35 = vld [vmem:[%s0 + $0x34] sm:$0xf]
    %v36 = vld [vmem:[%s0 + $0x38] sm:$0xf]
    %v37 = vld [vmem:[%s0 + $0x3c] sm:$0xf]
    %v38 = vld [vmem:[%s0 + $0x40] sm:$0xf]
    %v39 = vld [vmem:[%s0 + $0x44] sm:$0xf]
    %v40 = vld [vmem:[%s0 + $0x48] sm:$0xf]
    %v41 = vld [vmem:[%s0 + $0x4c] sm:$0xf]
    %v42 = vld [vmem:[%s0 + $0x50] sm:$0xf]
    %v43 = vld [vmem:[%s0 + $0x54] sm:$0xf]
    %v44 = vld [vmem:[%s0 + $0x58] sm:$0xf]
    %v45 = vld [vmem:[%s0 + $0x5c] sm:$0xf]
    %v46 = vld [vmem:[%s0 + $0x60] sm:$0xf]
    %v47 = vld [vmem:[%s0 + $0x64] sm:$0xf]
    %v48 = vld [vmem:[%s0 + $0x68] sm:$0xf]
    %v49 = vld [vmem:[%s0 + $0x6c] sm:$0xf]
    %v50 = vld [vmem:[%s0 + $0x70] sm:$0xf]
    %v51 = vld [vmem:[%s0 + $0x74] sm:$0xf]
    %v52 = vld [vmem:[%s0 + $0x78] sm:$0xf]
    %v53 = vld [vmem:[%s0 + $0x7c] sm:$0xf]
    %v54 = vld [vmem:[%s0 + $0x80] sm:$0xf]
    %v55 = vld [vmem:[%s0 + $0x84] sm:$0xf]
    %v56 = vld [vmem:[%s0 + $0x88] sm:$0xf]
    %v57 = vld [vmem:[%s0 + $0x8c] sm:$0xf]
    %v58 = vld [vmem:[%s0 + $0x90] sm:$0xf]
    %v59 = vld [vmem:[%s0 + $0x94] sm:$0xf]
    %v60 = vld [vmem:[%s0 + $0x98] sm:$0xf]
    %v61 = vld [vmem:[%s0 + $0x9c] sm:$0xf]
    %v62 = vld [vmem:[%s0 + $0xa0] sm:$0xf]
    %v63 = vld [vmem:[%s0 + $0xa4] sm:$0xf]
    %v64 = vld [vmem:[%s0 + $0xa8] sm:$0xf]
    %v65 = vld [vmem:[%s0 + $0xac] sm:$0xf]
    %v66 = vld [vmem:[%s0 + $0xb0] sm:$0xf]
    %v67 = vld [vmem:[%s0 + $0xb4] sm:$0xf]
    %v68 = vld [vmem:[%s0 + $0xb8] sm:$0xf]
    %v69 = vld [vmem:[%s0 + $0xbc] sm:$0xf]
    %v70 = vld [vmem:[%s0 + $0xc0] sm:$0xf]
    %v71 = vld [vmem:[%s0 + $0xc4] sm:$0xf]
    %v72 = vld [vmem:[%s0 + $0xc8] sm:$0xf]
    %v73 = vld [vmem:[%s0 + $0xcc] sm:$0xf]
    %v74 = vld [vmem:[%s0 + $0xd0] sm:$0xf]
    %v75 = vld [vmem:[%s0 + $0xd4] sm:$0xf]
    %v76 = vld [vmem:[%s0 + $0xd8] sm:$0xf]
    %v77 = vld [vmem:[%s0 + $0xdc] sm:$0xf]
    %v78 = vld [vmem:[%s0 + $0xe0] sm:$0xf]
    %v79 = vld [vmem:[%s0 + $0xe4] sm:$0xf]
    %v80 = vld [vmem:[%s0 + $0xe8] sm:$0xf]
    %v81 = vld [vmem:[%s0 + $0xec] sm:$0xf]
    %v82 = vld [vmem:[%s0 + $0xf0] sm:$0xf]
    %v83 = vld [vmem:[%s0 + $0xf4] sm:$0xf]
    %v84 = vld [vmem:[%s0 + $0xf8] sm:$0xf]
    %v85 = vld [vmem:[%s0 + $0xfc] sm:$0xf]
    %v86 = vld [vmem:[%s1] sm:$0xf]
    %v87 = vld [vmem:[%s1 + $0x4] sm:$0xf]
    %v88 = vld [vmem:[%s1 + $0x8] sm:$0xf]
    %v89 = vld [vmem:[%s1 + $0xc] sm:$0xf]
    %v90 = vld [vmem:[%s1 + $0x10] sm:$0x7]
    %v155 = vunpack.c.l.b16 %v22
    %v156 = vunpack.c.l.b16 %v23
    %v157 = vunpack.c.l.b16 %v24
    %v158 = vunpack.c.l.b16 %v25
    %v159 = vunpack.c.l.b16 %v26
    %v160 = vunpack.c.l.b16 %v27
    %v161 = vunpack.c.l.b16 %v28
    %v162 = vunpack.c.l.b16 %v29
    %v163 = vunpack.c.l.b16 %v30
    %v164 = vunpack.c.l.b16 %v31
    %v165 = vunpack.c.l.b16 %v32
    %v166 = vunpack.c.l.b16 %v33
    %v167 = vunpack.c.l.b16 %v34
    %v168 = vunpack.c.l.b16 %v35
    %v169 = vunpack.c.l.b16 %v36
    %v170 = vunpack.c.l.b16 %v37
    %v171 = vunpack.c.l.b16 %v38
    %v172 = vunpack.c.l.b16 %v39
    %v173 = vunpack.c.l.b16 %v40
    %v174 = vunpack.c.l.b16 %v41
    %v175 = vunpack.c.l.b16 %v42
    %v176 = vunpack.c.l.b16 %v43
    %v177 = vunpack.c.l.b16 %v44
    %v178 = vunpack.c.l.b16 %v45
    %v179 = vunpack.c.l.b16 %v46
    %v180 = vunpack.c.l.b16 %v47
    %v181 = vunpack.c.l.b16 %v48
    %v182 = vunpack.c.l.b16 %v49
    %v183 = vunpack.c.l.b16 %v50
    %v184 = vunpack.c.l.b16 %v51
    %v185 = vunpack.c.l.b16 %v52
    %v186 = vunpack.c.l.b16 %v53
    %v187 = vunpack.c.l.b16 %v54
    %v188 = vunpack.c.l.b16 %v55
    %v189 = vunpack.c.l.b16 %v56
    %v190 = vunpack.c.l.b16 %v57
    %v191 = vunpack.c.l.b16 %v58
    %v192 = vunpack.c.l.b16 %v59
    %v193 = vunpack.c.l.b16 %v60
    %v194 = vunpack.c.l.b16 %v61
    %v195 = vunpack.c.l.b16 %v62
    %v196 = vunpack.c.l.b16 %v63
    %v197 = vunpack.c.l.b16 %v64
    %v198 = vunpack.c.l.b16 %v65
    %v199 = vunpack.c.l.b16 %v66
    %v200 = vunpack.c.l.b16 %v67
    %v201 = vunpack.c.l.b16 %v68
    %v202 = vunpack.c.l.b16 %v69
    %v203 = vunpack.c.l.b16 %v70
    %v204 = vunpack.c.l.b16 %v71
    %v205 = vunpack.c.l.b16 %v72
    %v206 = vunpack.c.l.b16 %v73
    %v207 = vunpack.c.l.b16 %v74
    %v208 = vunpack.c.l.b16 %v75
    %v209 = vunpack.c.l.b16 %v76
    %v210 = vunpack.c.l.b16 %v77
    %v211 = vunpack.c.l.b16 %v78
    %v212 = vunpack.c.l.b16 %v79
    %v213 = vunpack.c.l.b16 %v80
    %v214 = vunpack.c.l.b16 %v81
    %v215 = vunpack.c.l.b16 %v82
    %v216 = vunpack.c.l.b16 %v83
    %v217 = vunpack.c.l.b16 %v84
    %v218 = vunpack.c.l.b16 %v85
    %v219 = vpack.c.b16 %v156, %v155
    %v220 = vpack.c.b16 %v158, %v157
    %v221 = vpack.c.b16 %v160, %v159
    %v222 = vpack.c.b16 %v162, %v161
    %v223 = vpack.c.b16 %v164, %v163
    %v224 = vpack.c.b16 %v166, %v165
    %v225 = vpack.c.b16 %v168, %v167
    %v226 = vpack.c.b16 %v170, %v169
    %v227 = vpack.c.b16 %v172, %v171
    %v228 = vpack.c.b16 %v174, %v173
    %v229 = vpack.c.b16 %v176, %v175
    %v230 = vpack.c.b16 %v178, %v177
    %v231 = vpack.c.b16 %v180, %v179
    %v232 = vpack.c.b16 %v182, %v181
    %v233 = vpack.c.b16 %v184, %v183
    %v234 = vpack.c.b16 %v186, %v185
    %v235 = vpack.c.b16 %v188, %v187
    %v236 = vpack.c.b16 %v190, %v189
    %v237 = vpack.c.b16 %v192, %v191
    %v238 = vpack.c.b16 %v194, %v193
    %v239 = vpack.c.b16 %v196, %v195
    %v240 = vpack.c.b16 %v198, %v197
    %v241 = vpack.c.b16 %v200, %v199
    %v242 = vpack.c.b16 %v202, %v201
    %v243 = vpack.c.b16 %v204, %v203
    %v244 = vpack.c.b16 %v206, %v205
    %v245 = vpack.c.b16 %v208, %v207
    %v246 = vpack.c.b16 %v210, %v209
    %v247 = vpack.c.b16 %v212, %v211
    %v248 = vpack.c.b16 %v214, %v213
    %v249 = vpack.c.b16 %v216, %v215
    %v250 = vpack.c.b16 %v218, %v217
    %v256 = vunpack.c.l.b16 %v86
    %v257 = vunpack.c.l.b16 %v87
    %v258 = vunpack.c.l.b16 %v88
    %v259 = vunpack.c.l.b16 %v89
    %v260 = vunpack.c.l.b16 %v90
    %v261 = vpack.c.b16 %v257, %v256
    %v262 = vpack.c.b16 %v259, %v258
    %v263 = vpack.c.b16 %v260, %v260
    %vm266 = vcmask 302080
    %v268 = vsel %vm266, %v219, 0
    %v271 = vsel %vm266, %v220, 0
    %v274 = vsel %vm266, %v221, 0
    %v277 = vsel %vm266, %v222, 0
    %v280 = vsel %vm266, %v223, 0
    %v283 = vsel %vm266, %v224, 0
    %v286 = vsel %vm266, %v225, 0
    %v289 = vsel %vm266, %v226, 0
    %v292 = vsel %vm266, %v227, 0
    %v295 = vsel %vm266, %v228, 0
    %v298 = vsel %vm266, %v229, 0
    %v301 = vsel %vm266, %v230, 0
    %v304 = vsel %vm266, %v231, 0
    %v307 = vsel %vm266, %v232, 0
    %v310 = vsel %vm266, %v233, 0
    %v313 = vsel %vm266, %v234, 0
    %v316 = vsel %vm266, %v235, 0
    %v319 = vsel %vm266, %v236, 0
    %v322 = vsel %vm266, %v237, 0
    %v325 = vsel %vm266, %v238, 0
    %v328 = vsel %vm266, %v239, 0
    %v331 = vsel %vm266, %v240, 0
    %v334 = vsel %vm266, %v241, 0
    %v337 = vsel %vm266, %v242, 0
    %v340 = vsel %vm266, %v243, 0
    %v343 = vsel %vm266, %v244, 0
    %v346 = vsel %vm266, %v245, 0
    %v349 = vsel %vm266, %v246, 0
    %v352 = vsel %vm266, %v247, 0
    %v355 = vsel %vm266, %v248, 0
    %v358 = vsel %vm266, %v249, 0
    %v361 = vsel %vm266, %v250, 0
    %vm363 = vcmask 1041408
    %vm364 = vcmask 1042432
    %v365 = vsel %vm363, 4294967295, 65535
    %v366 = vsel %vm364, %v365, 0
    %v368 = vand.u32 %v263, %v366
    %370 = vmatprep.subr.bf16.mxu0 0
    %371 = vmatpush1.bf16.msra.mxu0 %v261
    %372 = vmatprep.subr.bf16.mxu0 0
    %373 = vmatpush1.bf16.msra.mxu0 %v262
    %374 = vmatprep.subr.bf16.mxu0 0
    %375 = vmatpush1.bf16.msra.mxu0 %v368
    %376 = vmatprep.subr.bf16.mxu0 0
    %377 = vmatpush1.bf16.msra.mxu0 0
    %378 = vmatprep.subr.bf16.mxu0 0
    %379 = vmatpush1.bf16.msra.mxu0 0
    %380 = vmatprep.subr.bf16.mxu0 0
    %381 = vmatpush1.bf16.msra.mxu0 0
    %382 = vmatprep.subr.bf16.mxu0 0
    %383 = vmatpush1.bf16.msra.mxu0 0
    %384 = vmatprep.subr.bf16.mxu0 0
    %385 = vmatpush1.bf16.msra.mxu0 0
    %386 = vmatprep.subr.bf16.mxu0 0
    %387 = vmatpush1.bf16.msra.mxu0 0
    %388 = vmatprep.subr.bf16.mxu0 0
    %389 = vmatpush1.bf16.msra.mxu0 0
    %390 = vmatprep.subr.bf16.mxu0 0
    %391 = vmatpush1.bf16.msra.mxu0 0
    %392 = vmatprep.subr.bf16.mxu0 0
    %393 = vmatpush1.bf16.msra.mxu0 0
    %394 = vmatprep.subr.bf16.mxu0 0
    %395 = vmatpush1.bf16.msra.mxu0 0
    %396 = vmatprep.subr.bf16.mxu0 0
    %397 = vmatpush1.bf16.msra.mxu0 0
    %398 = vmatprep.subr.bf16.mxu0 0
    %399 = vmatpush1.bf16.msra.mxu0 0
    %400 = vmatprep.subr.bf16.mxu0 0
    %401 = vmatpush1.bf16.msra.mxu0 0
    %402 = vmatprep.mubr.bf16.mxu0 0
    %403 = vmatmul.mubr.bf16.gmra.mrb[0].mxu0 %v268
    %v404 = vpop.f32.mrb[0].mxu0
    %v405 = vadd.f32 0.0, %v404
    %v406 = vpop.f32.mrb[0].mxu0
    %v407 = vpop.f32.mrb[0].mxu0
    %v408 = vadd.f32 0.0, %v407
    %v409 = vpop.f32.mrb[0].mxu0
    %410 = vmatprep.mubr.bf16.mxu0 0
    %411 = vmatmul.mubr.bf16.gmra.mrb[0].mxu0 %v271
    %v412 = vpop.f32.mrb[0].mxu0
    %v413 = vadd.f32 0.0, %v412
    %v414 = vpop.f32.mrb[0].mxu0
    %v415 = vpop.f32.mrb[0].mxu0
    %v416 = vadd.f32 0.0, %v415
    %v417 = vpop.f32.mrb[0].mxu0
    %418 = vmatprep.mubr.bf16.mxu0 0
    %419 = vmatmul.mubr.bf16.gmra.mrb[0].mxu0 %v274
    %v420 = vpop.f32.mrb[0].mxu0
    %v421 = vadd.f32 0.0, %v420
    %v422 = vpop.f32.mrb[0].mxu0
    %v423 = vpop.f32.mrb[0].mxu0
    %v424 = vadd.f32 0.0, %v423
    %v425 = vpop.f32.mrb[0].mxu0
    %426 = vmatprep.mubr.bf16.mxu0 0
    %427 = vmatmul.mubr.bf16.gmra.mrb[0].mxu0 %v277
    %v428 = vpop.f32.mrb[0].mxu0
    %v429 = vadd.f32 0.0, %v428
    %v430 = vpop.f32.mrb[0].mxu0
    %v431 = vpop.f32.mrb[0].mxu0
    %v432 = vadd.f32 0.0, %v431
    %v433 = vpop.f32.mrb[0].mxu0
    %434 = vmatprep.mubr.bf16.mxu0 0
    %435 = vmatmul.mubr.bf16.gmra.mrb[0].mxu0 %v280
    %v436 = vpop.f32.mrb[0].mxu0
    %v437 = vadd.f32 0.0, %v436
    %v438 = vpop.f32.mrb[0].mxu0
    %v439 = vpop.f32.mrb[0].mxu0
    %v440 = vadd.f32 0.0, %v439
    %v441 = vpop.f32.mrb[0].mxu0
    %442 = vmatprep.mubr.bf16.mxu0 0
    %443 = vmatmul.mubr.bf16.gmra.mrb[0].mxu0 %v283
    %v444 = vpop.f32.mrb[0].mxu0
    %v445 = vadd.f32 0.0, %v444
    %v446 = vpop.f32.mrb[0].mxu0
    %v447 = vpop.f32.mrb[0].mxu0
    %v448 = vadd.f32 0.0, %v447
    %v449 = vpop.f32.mrb[0].mxu0
    %450 = vmatprep.mubr.bf16.mxu0 0
    %451 = vmatmul.mubr.bf16.gmra.mrb[0].mxu0 %v286
    %v452 = vpop.f32.mrb[0].mxu0
    %v453 = vadd.f32 0.0, %v452
    %v454 = vpop.f32.mrb[0].mxu0
    %v455 = vpop.f32.mrb[0].mxu0
    %v456 = vadd.f32 0.0, %v455
    %v457 = vpop.f32.mrb[0].mxu0
    %458 = vmatprep.mubr.bf16.mxu0 0
    %459 = vmatmul.mubr.bf16.gmra.mrb[0].mxu0 %v289
    %v460 = vpop.f32.mrb[0].mxu0
    %v461 = vadd.f32 0.0, %v460
    %v462 = vpop.f32.mrb[0].mxu0
    %v463 = vpop.f32.mrb[0].mxu0
    %v464 = vadd.f32 0.0, %v463
    %v465 = vpop.f32.mrb[0].mxu0
    %466 = vmatprep.mubr.bf16.mxu0 0
    %467 = vmatmul.mubr.bf16.gmra.mrb[0].mxu0 %v292
    %v468 = vpop.f32.mrb[0].mxu0
    %v469 = vadd.f32 0.0, %v468
    %v470 = vpop.f32.mrb[0].mxu0
    %v471 = vpop.f32.mrb[0].mxu0
    %v472 = vadd.f32 0.0, %v471
    %v473 = vpop.f32.mrb[0].mxu0
    %474 = vmatprep.mubr.bf16.mxu0 0
    %475 = vmatmul.mubr.bf16.gmra.mrb[0].mxu0 %v295
    %v476 = vpop.f32.mrb[0].mxu0
    %v477 = vadd.f32 0.0, %v476
    %v478 = vpop.f32.mrb[0].mxu0
    %v479 = vpop.f32.mrb[0].mxu0
    %v480 = vadd.f32 0.0, %v479
    %v481 = vpop.f32.mrb[0].mxu0
    %482 = vmatprep.mubr.bf16.mxu0 0
    %483 = vmatmul.mubr.bf16.gmra.mrb[0].mxu0 %v298
    %v484 = vpop.f32.mrb[0].mxu0
    %v485 = vadd.f32 0.0, %v484
    %v486 = vpop.f32.mrb[0].mxu0
    %v487 = vpop.f32.mrb[0].mxu0
    %v488 = vadd.f32 0.0, %v487
    %v489 = vpop.f32.mrb[0].mxu0
    %490 = vmatprep.mubr.bf16.mxu0 0
    %491 = vmatmul.mubr.bf16.gmra.mrb[0].mxu0 %v301
    %v492 = vpop.f32.mrb[0].mxu0
    %v493 = vadd.f32 0.0, %v492
    %v494 = vpop.f32.mrb[0].mxu0
    %v495 = vpop.f32.mrb[0].mxu0
    %v496 = vadd.f32 0.0, %v495
    %v497 = vpop.f32.mrb[0].mxu0
    %498 = vmatprep.mubr.bf16.mxu0 0
    %499 = vmatmul.mubr.bf16.gmra.mrb[0].mxu0 %v304
    %v500 = vpop.f32.mrb[0].mxu0
    %v501 = vadd.f32 0.0, %v500
    %v502 = vpop.f32.mrb[0].mxu0
    %v503 = vpop.f32.mrb[0].mxu0
    %v504 = vadd.f32 0.0, %v503
    %v505 = vpop.f32.mrb[0].mxu0
    %506 = vmatprep.mubr.bf16.mxu0 0
    %507 = vmatmul.mubr.bf16.gmra.mrb[0].mxu0 %v307
    %v508 = vpop.f32.mrb[0].mxu0
    %v509 = vadd.f32 0.0, %v508
    %v510 = vpop.f32.mrb[0].mxu0
    %v511 = vpop.f32.mrb[0].mxu0
    %v512 = vadd.f32 0.0, %v511
    %v513 = vpop.f32.mrb[0].mxu0
    %514 = vmatprep.mubr.bf16.mxu0 0
    %515 = vmatmul.mubr.bf16.gmra.mrb[0].mxu0 %v310
    %v516 = vpop.f32.mrb[0].mxu0
    %v517 = vadd.f32 0.0, %v516
    %v518 = vpop.f32.mrb[0].mxu0
    %v519 = vpop.f32.mrb[0].mxu0
    %v520 = vadd.f32 0.0, %v519
    %v521 = vpop.f32.mrb[0].mxu0
    %522 = vmatprep.mubr.bf16.mxu0 0
    %523 = vmatmul.mubr.bf16.gmra.mrb[0].mxu0 %v313
    %v524 = vpop.f32.mrb[0].mxu0
    %v525 = vadd.f32 0.0, %v524
    %v526 = vpop.f32.mrb[0].mxu0
    %v527 = vpop.f32.mrb[0].mxu0
    %v528 = vadd.f32 0.0, %v527
    %v529 = vpop.f32.mrb[0].mxu0
    %530 = vmatprep.mubr.bf16.mxu0 0
    %531 = vmatmul.mubr.bf16.gmra.mrb[0].mxu0 %v316
    %v532 = vpop.f32.mrb[0].mxu0
    %v533 = vadd.f32 0.0, %v532
    %v534 = vpop.f32.mrb[0].mxu0
    %v535 = vpop.f32.mrb[0].mxu0
    %v536 = vadd.f32 0.0, %v535
    %v537 = vpop.f32.mrb[0].mxu0
    %538 = vmatprep.mubr.bf16.mxu0 0
    %539 = vmatmul.mubr.bf16.gmra.mrb[0].mxu0 %v319
    %v540 = vpop.f32.mrb[0].mxu0
    %v541 = vadd.f32 0.0, %v540
    %v542 = vpop.f32.mrb[0].mxu0
    %v543 = vpop.f32.mrb[0].mxu0
    %v544 = vadd.f32 0.0, %v543
    %v545 = vpop.f32.mrb[0].mxu0
    %546 = vmatprep.mubr.bf16.mxu0 0
    %547 = vmatmul.mubr.bf16.gmra.mrb[0].mxu0 %v322
    %v548 = vpop.f32.mrb[0].mxu0
    %v549 = vadd.f32 0.0, %v548
    %v550 = vpop.f32.mrb[0].mxu0
    %v551 = vpop.f32.mrb[0].mxu0
    %v552 = vadd.f32 0.0, %v551
    %v553 = vpop.f32.mrb[0].mxu0
    %554 = vmatprep.mubr.bf16.mxu0 0
    %555 = vmatmul.mubr.bf16.gmra.mrb[0].mxu0 %v325
    %v556 = vpop.f32.mrb[0].mxu0
    %v557 = vadd.f32 0.0, %v556
    %v558 = vpop.f32.mrb[0].mxu0
    %v559 = vpop.f32.mrb[0].mxu0
    %v560 = vadd.f32 0.0, %v559
    %v561 = vpop.f32.mrb[0].mxu0
    %562 = vmatprep.mubr.bf16.mxu0 0
    %563 = vmatmul.mubr.bf16.gmra.mrb[0].mxu0 %v328
    %v564 = vpop.f32.mrb[0].mxu0
    %v565 = vadd.f32 0.0, %v564
    %v566 = vpop.f32.mrb[0].mxu0
    %v567 = vpop.f32.mrb[0].mxu0
    %v568 = vadd.f32 0.0, %v567
    %v569 = vpop.f32.mrb[0].mxu0
    %570 = vmatprep.mubr.bf16.mxu0 0
    %571 = vmatmul.mubr.bf16.gmra.mrb[0].mxu0 %v331
    %v572 = vpop.f32.mrb[0].mxu0
    %v573 = vadd.f32 0.0, %v572
    %v574 = vpop.f32.mrb[0].mxu0
    %v575 = vpop.f32.mrb[0].mxu0
    %v576 = vadd.f32 0.0, %v575
    %v577 = vpop.f32.mrb[0].mxu0
    %578 = vmatprep.mubr.bf16.mxu0 0
    %579 = vmatmul.mubr.bf16.gmra.mrb[0].mxu0 %v334
    %v580 = vpop.f32.mrb[0].mxu0
    %v581 = vadd.f32 0.0, %v580
    %v582 = vpop.f32.mrb[0].mxu0
    %v583 = vpop.f32.mrb[0].mxu0
    %v584 = vadd.f32 0.0, %v583
    %v585 = vpop.f32.mrb[0].mxu0
    %586 = vmatprep.mubr.bf16.mxu0 0
    %587 = vmatmul.mubr.bf16.gmra.mrb[0].mxu0 %v337
    %v588 = vpop.f32.mrb[0].mxu0
    %v589 = vadd.f32 0.0, %v588
    %v590 = vpop.f32.mrb[0].mxu0
    %v591 = vpop.f32.mrb[0].mxu0
    %v592 = vadd.f32 0.0, %v591
    %v593 = vpop.f32.mrb[0].mxu0
    %594 = vmatprep.mubr.bf16.mxu0 0
    %595 = vmatmul.mubr.bf16.gmra.mrb[0].mxu0 %v340
    %v596 = vpop.f32.mrb[0].mxu0
    %v597 = vadd.f32 0.0, %v596
    %v598 = vpop.f32.mrb[0].mxu0
    %v599 = vpop.f32.mrb[0].mxu0
    %v600 = vadd.f32 0.0, %v599
    %v601 = vpop.f32.mrb[0].mxu0
    %602 = vmatprep.mubr.bf16.mxu0 0
    %603 = vmatmul.mubr.bf16.gmra.mrb[0].mxu0 %v343
    %v604 = vpop.f32.mrb[0].mxu0
    %v605 = vadd.f32 0.0, %v604
    %v606 = vpop.f32.mrb[0].mxu0
    %v607 = vpop.f32.mrb[0].mxu0
    %v608 = vadd.f32 0.0, %v607
    %v609 = vpop.f32.mrb[0].mxu0
    %610 = vmatprep.mubr.bf16.mxu0 0
    %611 = vmatmul.mubr.bf16.gmra.mrb[0].mxu0 %v346
    %v612 = vpop.f32.mrb[0].mxu0
    %v613 = vadd.f32 0.0, %v612
    %v614 = vpop.f32.mrb[0].mxu0
    %v615 = vpop.f32.mrb[0].mxu0
    %v616 = vadd.f32 0.0, %v615
    %v617 = vpop.f32.mrb[0].mxu0
    %618 = vmatprep.mubr.bf16.mxu0 0
    %619 = vmatmul.mubr.bf16.gmra.mrb[0].mxu0 %v349
    %v620 = vpop.f32.mrb[0].mxu0
    %v621 = vadd.f32 0.0, %v620
    %v622 = vpop.f32.mrb[0].mxu0
    %v623 = vpop.f32.mrb[0].mxu0
    %v624 = vadd.f32 0.0, %v623
    %v625 = vpop.f32.mrb[0].mxu0
    %626 = vmatprep.mubr.bf16.mxu0 0
    %627 = vmatmul.mubr.bf16.gmra.mrb[0].mxu0 %v352
    %v628 = vpop.f32.mrb[0].mxu0
    %v629 = vadd.f32 0.0, %v628
    %v630 = vpop.f32.mrb[0].mxu0
    %v631 = vpop.f32.mrb[0].mxu0
    %v632 = vadd.f32 0.0, %v631
    %v633 = vpop.f32.mrb[0].mxu0
    %634 = vmatprep.mubr.bf16.mxu0 0
    %635 = vmatmul.mubr.bf16.gmra.mrb[0].mxu0 %v355
    %v636 = vpop.f32.mrb[0].mxu0
    %v637 = vadd.f32 0.0, %v636
    %v638 = vpop.f32.mrb[0].mxu0
    %v639 = vpop.f32.mrb[0].mxu0
    %v640 = vadd.f32 0.0, %v639
    %v641 = vpop.f32.mrb[0].mxu0
    %642 = vmatprep.mubr.bf16.mxu0 0
    %643 = vmatmul.mubr.bf16.gmra.mrb[0].mxu0 %v358
    %v644 = vpop.f32.mrb[0].mxu0
    %v645 = vadd.f32 0.0, %v644
    %v646 = vpop.f32.mrb[0].mxu0
    %v647 = vpop.f32.mrb[0].mxu0
    %v648 = vadd.f32 0.0, %v647
    %v649 = vpop.f32.mrb[0].mxu0
    %650 = vmatprep.mubr.bf16.mxu0 0
    %651 = vmatmul.mubr.bf16.gmra.mrb[0].mxu0 %v361
    %v652 = vpop.f32.mrb[0].mxu0
    %v653 = vadd.f32 0.0, %v652
    %v654 = vpop.f32.mrb[0].mxu0
    %v655 = vpop.f32.mrb[0].mxu0
    %v656 = vadd.f32 0.0, %v655
    %v657 = vpop.f32.mrb[0].mxu0
    %658 = vdwg.mxu0
    %v659 = vmax.f32 %v405, 0.0
    %v660 = vmax.f32 %v408, 0.0
    %v661 = vmax.f32 %v413, 0.0
    %v662 = vmax.f32 %v416, 0.0
    %v663 = vmax.f32 %v421, 0.0
    %v664 = vmax.f32 %v424, 0.0
    %v665 = vmax.f32 %v429, 0.0
    %v666 = vmax.f32 %v432, 0.0
    %v667 = vmax.f32 %v437, 0.0
    %v668 = vmax.f32 %v440, 0.0
    %v669 = vmax.f32 %v445, 0.0
    %v670 = vmax.f32 %v448, 0.0
    %v671 = vmax.f32 %v453, 0.0
    %v672 = vmax.f32 %v456, 0.0
    %v673 = vmax.f32 %v461, 0.0
    %v674 = vmax.f32 %v464, 0.0
    %v675 = vmax.f32 %v469, 0.0
    %v676 = vmax.f32 %v472, 0.0
    %v677 = vmax.f32 %v477, 0.0
    %v678 = vmax.f32 %v480, 0.0
    %v679 = vmax.f32 %v485, 0.0
    %v680 = vmax.f32 %v488, 0.0
    %v681 = vmax.f32 %v493, 0.0
    %v682 = vmax.f32 %v496, 0.0
    %v683 = vmax.f32 %v501, 0.0
    %v684 = vmax.f32 %v504, 0.0
    %v685 = vmax.f32 %v509, 0.0
    %v686 = vmax.f32 %v512, 0.0
    %v687 = vmax.f32 %v517, 0.0
    %v688 = vmax.f32 %v520, 0.0
    %v689 = vmax.f32 %v525, 0.0
    %v690 = vmax.f32 %v528, 0.0
    %v691 = vmax.f32 %v533, 0.0
    %v692 = vmax.f32 %v536, 0.0
    %v693 = vmax.f32 %v541, 0.0
    %v694 = vmax.f32 %v544, 0.0
    %v695 = vmax.f32 %v549, 0.0
    %v696 = vmax.f32 %v552, 0.0
    %v697 = vmax.f32 %v557, 0.0
    %v698 = vmax.f32 %v560, 0.0
    %v699 = vmax.f32 %v565, 0.0
    %v700 = vmax.f32 %v568, 0.0
    %v701 = vmax.f32 %v573, 0.0
    %v702 = vmax.f32 %v576, 0.0
    %v703 = vmax.f32 %v581, 0.0
    %v704 = vmax.f32 %v584, 0.0
    %v705 = vmax.f32 %v589, 0.0
    %v706 = vmax.f32 %v592, 0.0
    %v707 = vmax.f32 %v597, 0.0
    %v708 = vmax.f32 %v600, 0.0
    %v709 = vmax.f32 %v605, 0.0
    %v710 = vmax.f32 %v608, 0.0
    %v711 = vmax.f32 %v613, 0.0
    %v712 = vmax.f32 %v616, 0.0
    %v713 = vmax.f32 %v621, 0.0
    %v714 = vmax.f32 %v624, 0.0
    %v715 = vmax.f32 %v629, 0.0
    %v716 = vmax.f32 %v632, 0.0
    %v717 = vmax.f32 %v637, 0.0
    %v718 = vmax.f32 %v640, 0.0
    %v719 = vmax.f32 %v645, 0.0
    %v720 = vmax.f32 %v648, 0.0
    %v721 = vmax.f32 %v653, 0.0
    %v722 = vmax.f32 %v656, 0.0
    %v723 = vpack.c.bf16 %v660, %v659
    %v724 = vpack.c.bf16 %v662, %v661
    %v725 = vpack.c.bf16 %v664, %v663
    %v726 = vpack.c.bf16 %v666, %v665
    %v727 = vpack.c.bf16 %v668, %v667
    %v728 = vpack.c.bf16 %v670, %v669
    %v729 = vpack.c.bf16 %v672, %v671
    %v730 = vpack.c.bf16 %v674, %v673
    %v731 = vpack.c.bf16 %v676, %v675
    %v732 = vpack.c.bf16 %v678, %v677
    %v733 = vpack.c.bf16 %v680, %v679
    %v734 = vpack.c.bf16 %v682, %v681
    %v735 = vpack.c.bf16 %v684, %v683
    %v736 = vpack.c.bf16 %v686, %v685
    %v737 = vpack.c.bf16 %v688, %v687
    %v738 = vpack.c.bf16 %v690, %v689
    %v739 = vpack.c.bf16 %v692, %v691
    %v740 = vpack.c.bf16 %v694, %v693
    %v741 = vpack.c.bf16 %v696, %v695
    %v742 = vpack.c.bf16 %v698, %v697
    %v743 = vpack.c.bf16 %v700, %v699
    %v744 = vpack.c.bf16 %v702, %v701
    %v745 = vpack.c.bf16 %v704, %v703
    %v746 = vpack.c.bf16 %v706, %v705
    %v747 = vpack.c.bf16 %v708, %v707
    %v748 = vpack.c.bf16 %v710, %v709
    %v749 = vpack.c.bf16 %v712, %v711
    %v750 = vpack.c.bf16 %v714, %v713
    %v751 = vpack.c.bf16 %v716, %v715
    %v752 = vpack.c.bf16 %v718, %v717
    %v753 = vpack.c.bf16 %v720, %v719
    %v754 = vpack.c.bf16 %v722, %v721
    %v755 = vld [vmem:[%s2] sm:$0xf]
    %v758 = vunpack.c.l.s4 1966171168
    %v759 = vunpack.c.0.s8 %v758
    %v760 = vlaneseq
    %v761 = vshrl.u32 %v760, 7
    %v762 = vsub.s32 %v759, %v761
    %v763 = vrot.slane %v755, %v762
    %v764 = vcombine.high %v763, %v763
    %v766 = vunpack.c.l.s4 1966171168
    %v767 = vunpack.c.0.s8 %v766
    %v768 = vlaneseq
    %v769 = vshrl.u32 %v768, 7
    %v770 = vsub.s32 %v767, %v769
    %v771 = vrot.slane %v763, %v770
    %v773 = vunpack.c.l.s4 1966171168
    %v774 = vunpack.c.0.s8 %v773
    %v775 = vlaneseq
    %v776 = vshrl.u32 %v775, 7
    %v777 = vsub.s32 %v774, %v776
    %v778 = vrot.slane %v764, %v777
    %v779 = vcombine.high %v771, %v771
    %v780 = vcombine.high %v778, %v778
    %785 = vmatprep.subr.bf16.mxu0 0
    %786 = vmatpush1.bf16.msra.mxu0 %v723
    %787 = vmatprep.subr.bf16.mxu0 0
    %788 = vmatpush1.bf16.msra.mxu0 %v724
    %789 = vmatprep.subr.bf16.mxu0 0
    %790 = vmatpush1.bf16.msra.mxu0 %v725
    %791 = vmatprep.subr.bf16.mxu0 0
    %792 = vmatpush1.bf16.msra.mxu0 %v726
    %793 = vmatprep.subr.bf16.mxu0 0
    %794 = vmatpush1.bf16.msra.mxu0 %v727
    %795 = vmatprep.subr.bf16.mxu0 0
    %796 = vmatpush1.bf16.msra.mxu0 %v728
    %797 = vmatprep.subr.bf16.mxu0 0
    %798 = vmatpush1.bf16.msra.mxu0 %v729
    %799 = vmatprep.subr.bf16.mxu0 0
    %800 = vmatpush1.bf16.msra.mxu0 %v730
    %801 = vmatprep.subr.bf16.mxu0 0
    %802 = vmatpush1.bf16.msra.mxu0 %v731
    %803 = vmatprep.subr.bf16.mxu0 0
    %804 = vmatpush1.bf16.msra.mxu0 %v732
    %805 = vmatprep.subr.bf16.mxu0 0
    %806 = vmatpush1.bf16.msra.mxu0 %v733
    %807 = vmatprep.subr.bf16.mxu0 0
    %808 = vmatpush1.bf16.msra.mxu0 %v734
    %809 = vmatprep.subr.bf16.mxu0 0
    %810 = vmatpush1.bf16.msra.mxu0 %v735
    %811 = vmatprep.subr.bf16.mxu0 0
    %812 = vmatpush1.bf16.msra.mxu0 %v736
    %813 = vmatprep.subr.bf16.mxu0 0
    %814 = vmatpush1.bf16.msra.mxu0 %v737
    %815 = vmatprep.subr.bf16.mxu0 0
    %816 = vmatpush1.bf16.msra.mxu0 %v738
    %817 = vmatprep.mubr.bf16.mxu0 %v778
    %818 = vmatmul.mubr.bf16.gmra.mrb[0].mxu0 %v771
    %v819 = vpop.f32.mrb[0].mxu0
    %v820 = vadd.f32 0.0, %v819
    %v821 = vpop.f32.mrb[0].mxu0
    %v822 = vpop.f32.mrb[0].mxu0
    %v823 = vpop.f32.mrb[0].mxu0
    %824 = vdwg.mxu0
    %825 = vmatprep.subr.bf16.mxu0 0
    %826 = vmatpush1.bf16.msra.mxu0 %v739
    %827 = vmatprep.subr.bf16.mxu0 0
    %828 = vmatpush1.bf16.msra.mxu0 %v740
    %829 = vmatprep.subr.bf16.mxu0 0
    %830 = vmatpush1.bf16.msra.mxu0 %v741
    %831 = vmatprep.subr.bf16.mxu0 0
    %832 = vmatpush1.bf16.msra.mxu0 %v742
    %833 = vmatprep.subr.bf16.mxu0 0
    %834 = vmatpush1.bf16.msra.mxu0 %v743
    %835 = vmatprep.subr.bf16.mxu0 0
    %836 = vmatpush1.bf16.msra.mxu0 %v744
    %837 = vmatprep.subr.bf16.mxu0 0
    %838 = vmatpush1.bf16.msra.mxu0 %v745
    %839 = vmatprep.subr.bf16.mxu0 0
    %840 = vmatpush1.bf16.msra.mxu0 %v746
    %841 = vmatprep.subr.bf16.mxu0 0
    %842 = vmatpush1.bf16.msra.mxu0 %v747
    %843 = vmatprep.subr.bf16.mxu0 0
    %844 = vmatpush1.bf16.msra.mxu0 %v748
    %845 = vmatprep.subr.bf16.mxu0 0
    %846 = vmatpush1.bf16.msra.mxu0 %v749
    %847 = vmatprep.subr.bf16.mxu0 0
    %848 = vmatpush1.bf16.msra.mxu0 %v750
    %849 = vmatprep.subr.bf16.mxu0 0
    %850 = vmatpush1.bf16.msra.mxu0 %v751
    %851 = vmatprep.subr.bf16.mxu0 0
    %852 = vmatpush1.bf16.msra.mxu0 %v752
    %853 = vmatprep.subr.bf16.mxu0 0
    %854 = vmatpush1.bf16.msra.mxu0 %v753
    %855 = vmatprep.subr.bf16.mxu0 0
    %856 = vmatpush1.bf16.msra.mxu0 %v754
    %857 = vmatprep.mubr.bf16.mxu0 %v780
    %858 = vmatmul.mubr.bf16.gmra.mrb[0].mxu0 %v779
    %v859 = vpop.f32.mrb[0].mxu0
    %v860 = vadd.f32 %v820, %v859
    %v861 = vpop.f32.mrb[0].mxu0
    %v862 = vpop.f32.mrb[0].mxu0
    %v863 = vpop.f32.mrb[0].mxu0
    %864 = vdwg.mxu0
    %v865 = vpack.c.bf16 %v860, %v860
    %v866 = vld [vmem:[%s3] sm:$0xf]
    %v867 = vld [vmem:[%s3 + $0x4] sm:$0xf]
    %v868 = vld [vmem:[%s3 + $0x8] sm:$0xf]
    %v869 = vld [vmem:[%s3 + $0xc] sm:$0xf]
    %v870 = vld [vmem:[%s3 + $0x10] sm:$0xf]
    %v871 = vld [vmem:[%s3 + $0x14] sm:$0xf]
    %v872 = vld [vmem:[%s3 + $0x18] sm:$0xf]
    %v873 = vld [vmem:[%s3 + $0x1c] sm:$0xf]
    %v874 = vld [vmem:[%s3 + $0x20] sm:$0xf]
    %v875 = vld [vmem:[%s3 + $0x24] sm:$0xf]
    %v876 = vld [vmem:[%s3 + $0x28] sm:$0xf]
    %v877 = vld [vmem:[%s3 + $0x2c] sm:$0xf]
    %v878 = vld [vmem:[%s3 + $0x30] sm:$0xf]
    %v879 = vld [vmem:[%s3 + $0x34] sm:$0xf]
    %v880 = vld [vmem:[%s3 + $0x38] sm:$0xf]
    %v881 = vld [vmem:[%s3 + $0x3c] sm:$0xf]
    %v882 = vld [vmem:[%s4] sm:$0x1]
    %v884 = vlaneseq
    %v885 = vshrl.u32 %v884, 7
    %v886 = vsub.s32 0, %v885
    %v887 = vrot.slane %v882, %v886
    %v905 = vunpack.c.l.b16 %v866
    %v906 = vunpack.c.l.b16 %v867
    %v907 = vunpack.c.l.b16 %v868
    %v908 = vunpack.c.l.b16 %v869
    %v909 = vunpack.c.l.b16 %v870
    %v910 = vunpack.c.l.b16 %v871
    %v911 = vunpack.c.l.b16 %v872
    %v912 = vunpack.c.l.b16 %v873
    %v913 = vunpack.c.l.b16 %v874
    %v914 = vunpack.c.l.b16 %v875
    %v915 = vunpack.c.l.b16 %v876
    %v916 = vunpack.c.l.b16 %v877
    %v917 = vunpack.c.l.b16 %v878
    %v918 = vunpack.c.l.b16 %v879
    %v919 = vunpack.c.l.b16 %v880
    %v920 = vunpack.c.l.b16 %v881
    %v921 = vpack.c.b16 %v906, %v905
    %v922 = vpack.c.b16 %v908, %v907
    %v923 = vpack.c.b16 %v910, %v909
    %v924 = vpack.c.b16 %v912, %v911
    %v925 = vpack.c.b16 %v914, %v913
    %v926 = vpack.c.b16 %v916, %v915
    %v927 = vpack.c.b16 %v918, %v917
    %v928 = vpack.c.b16 %v920, %v919
    %937 = vmatprep.subr.bf16.mxu0 0
    %938 = vmatpush1.bf16.msra.mxu0 %v921
    %939 = vmatprep.subr.bf16.mxu0 0
    %940 = vmatpush1.bf16.msra.mxu0 %v922
    %941 = vmatprep.subr.bf16.mxu0 0
    %942 = vmatpush1.bf16.msra.mxu0 %v923
    %943 = vmatprep.subr.bf16.mxu0 0
    %944 = vmatpush1.bf16.msra.mxu0 %v924
    %945 = vmatprep.subr.bf16.mxu0 0
    %946 = vmatpush1.bf16.msra.mxu0 %v925
    %947 = vmatprep.subr.bf16.mxu0 0
    %948 = vmatpush1.bf16.msra.mxu0 %v926
    %949 = vmatprep.subr.bf16.mxu0 0
    %950 = vmatpush1.bf16.msra.mxu0 %v927
    %951 = vmatprep.subr.bf16.mxu0 0
    %952 = vmatpush1.bf16.msra.mxu0 %v928
    %953 = vmatprep.subr.bf16.mxu0 0
    %954 = vmatpush1.bf16.msra.mxu0 0
    %955 = vmatprep.subr.bf16.mxu0 0
    %956 = vmatpush1.bf16.msra.mxu0 0
    %957 = vmatprep.subr.bf16.mxu0 0
    %958 = vmatpush1.bf16.msra.mxu0 0
    %959 = vmatprep.subr.bf16.mxu0 0
    %960 = vmatpush1.bf16.msra.mxu0 0
    %961 = vmatprep.subr.bf16.mxu0 0
    %962 = vmatpush1.bf16.msra.mxu0 0
    %963 = vmatprep.subr.bf16.mxu0 0
    %964 = vmatpush1.bf16.msra.mxu0 0
    %965 = vmatprep.subr.bf16.mxu0 0
    %966 = vmatpush1.bf16.msra.mxu0 0
    %967 = vmatprep.subr.bf16.mxu0 0
    %968 = vmatpush1.bf16.msra.mxu0 0
    %969 = vmatprep.mubr.bf16.mxu0 0
    %970 = vmatmul.mubr.bf16.gmra.mrb[0].mxu0 %v865
    %v971 = vpop.f32.mrb[0].mxu0
    %v972 = vadd.f32 %v887, %v971
    %v973 = vpop.f32.mrb[0].mxu0
    %v974 = vpop.f32.mrb[0].mxu0
    %v975 = vpop.f32.mrb[0].mxu0
    %976 = vdwg.mxu0
    %977 = vst [vmem:[#allocation2] sm:$0x3] %v972
    // Predicated region
    $region22: #{deep_classifier_forward.1} parent=1 // pred_check
      _
    $region23: #{deep_classifier_forward.1} parent=1 // pred_check_branch
      %979 = sbr.rel (0) target = $region25
    $region24: #{deep_classifier_forward.1} parent=1 // pred_region
      %s981 = ssub.s32 32, 32
      %982 = vsyncadd [#allocation3], %s981
      %s984 = sshll.u32 [#allocation2], 4
      %s985 = int_to_ptr.vmem [resolvable:$true] %s984
      %987 = dma.vmem_to_hbm [thread:$0]  %s985, 32, %s5, [#allocation3]
    $region25: #{deep_classifier_forward.1} parent=1 // pred_fallthru
      _
    // Predicated region
    $region26: #{deep_classifier_forward.1} parent=1 // pred_check
      _
    $region27: #{deep_classifier_forward.1} parent=1 // pred_check_branch
      %989 = sbr.rel (0) target = $region29
    $region28: #{deep_classifier_forward.1} parent=1 // pred_region
      %990 = dma.done [#allocation3], 32
    $region29: #{deep_classifier_forward.1} parent=1 // pred_fallthru
      _
    %991 = vsyncpa [#allocation3], 1

</llo_original>
